<compile_context>
chip_gen: v6e
topology: v6e:2x2x1
jax: 0.10.0
libtpu: 0.0.40
codegen_flags: <defaults>
</compile_context>

<pallas_src>
import math
import functools

import jax
import jax.numpy as jnp
from jax import lax
from jax.experimental import pallas as pl
from jax.experimental.pallas import tpu as pltpu


def _mha_kernel(x_ref, wqkv_ref, bqkv_ref, wproj_ref, bproj_ref, o_ref,
                *, seq_len, d_model, num_heads, q_tile):
    head_dim = d_model // num_heads
    scale = 1.0 / math.sqrt(head_dim)
    dt = x_ref.dtype  # native compute dtype fed to the MXU (bf16 stays bf16)

    x = x_ref[0]  # (S, D), NO up-cast of the matmul operand

    # --- QKV projection once per batch element, f32 accumulation on the MXU ---
    qkv = jnp.dot(x, wqkv_ref[...], preferred_element_type=jnp.float32)
    qkv = qkv + bqkv_ref[...].astype(jnp.float32)            # (S, 3D) f32

    # Fold the attention scale into q once; cast q/k/v back to the input dtype
    # so the attention matmuls use the fast MXU path when inputs are bf16.
    q_all = (qkv[:, 0 * d_model:1 * d_model] * scale).astype(dt)   # (S, D)
    k_all = qkv[:, 1 * d_model:2 * d_model].astype(dt)             # (S, D)
    v_all = qkv[:, 2 * d_model:3 * d_model].astype(dt)             # (S, D)

    w_proj = wproj_ref[...]
    b_proj = bproj_ref[...].astype(jnp.float32)

    n_q_tiles = seq_len // q_tile
    for qi in range(n_q_tiles):            # static unroll over query tiles
        r0 = qi * q_tile
        head_out = []
        for h in range(num_heads):         # static unroll over heads: 2-D matmuls only
            c0 = h * head_dim
            q_h = q_all[r0:r0 + q_tile, c0:c0 + head_dim]   # (tq, hd)
            k_h = k_all[:, c0:c0 + head_dim]                # (S, hd)
            v_h = v_all[:, c0:c0 + head_dim]                # (S, hd)

            # scores: (tq, S) -- contraction on the last dim of both (no
            # materialized transpose), f32 accumulation.
            s = lax.dot_general(q_h, k_h, (((1,), (1,)), ((), ())),
                                preferred_element_type=jnp.float32)

            # softmax (f32) with deferred normalization (flash style).
            m = jnp.max(s, axis=-1, keepdims=True)
            p = jnp.exp(s - m)
            denom = jnp.sum(p, axis=-1, keepdims=True)
            inv = pl.reciprocal(denom, approx=True)         # EUP slot, ~free

            o_h = jnp.dot(p.astype(dt), v_h,
                          preferred_element_type=jnp.float32)   # (tq, hd) f32
            head_out.append((o_h * inv).astype(dt))             # normalize on (tq, hd)

        ctx = jnp.concatenate(head_out, axis=-1)                 # (tq, D)

        # Output projection for this query tile, f32 accumulation + bias.
        y = jnp.dot(ctx, w_proj, preferred_element_type=jnp.float32) + b_proj
        o_ref[0, r0:r0 + q_tile, :] = y.astype(o_ref.dtype)


def _pick_q_tile(seq_len):
    # Prefer MXU-friendly 256/128-row query tiles; fall back to the full
    # sequence for small S (the test uses S=8).
    for t in (256, 128, 64, 32, 16, 8):
        if seq_len >= t and seq_len % t == 0:
            return t
    return seq_len


def multi_head_attention(x, w_qkv_t, b_qkv, w_proj_t, b_proj, *, num_heads):
    """x: (B, S, D); w_qkv_t: (D, 3D); b_qkv: (1, 3D); w_proj_t: (D, D); b_proj: (1, D)."""
    B, S, D = x.shape
    assert D % num_heads == 0
    q_tile = _pick_q_tile(S)
    assert S % q_tile == 0

    # --- explicit VMEM budget (re-derived for v7x's 64 MiB / 32 MiB scoped) ---
    itemsize = jnp.dtype(x.dtype).itemsize
    w_itemsize = jnp.dtype(w_qkv_t.dtype).itemsize
    weight_bytes = (D * 3 * D + 3 * D + D * D + D) * w_itemsize
    io_bytes = 2 * 2 * S * D * itemsize            # double-buffered x-in / out blocks
    live_f32 = S * 3 * D + 3 * S * D + 2 * q_tile * S + q_tile * D
    vmem_est = 2 * weight_bytes + io_bytes + 4 * live_f32
    vmem_limit = int(min(max(2 * vmem_est, 4 * 2**20), 32 * 2**20))

    kernel = functools.partial(_mha_kernel, seq_len=S, d_model=D,
                               num_heads=num_heads, q_tile=q_tile)

    # NOTE: the weight/bias blocks have constant index_maps, so the pipeline
    # only fetches them once; single-buffering them (pl.Buffered(1)) would
    # additionally reclaim their second VMEM buffer on VMEM-tight chips.
    return pl.pallas_call(
        kernel,
        out_shape=jax.ShapeDtypeStruct((B, S, D), x.dtype),
        grid=(B,),
        in_specs=[
            pl.BlockSpec((1, S, D), lambda b: (b, 0, 0)),
            pl.BlockSpec((D, 3 * D), lambda b: (0, 0)),
            pl.BlockSpec((1, 3 * D), lambda b: (0, 0)),
            pl.BlockSpec((D, D), lambda b: (0, 0)),
            pl.BlockSpec((1, D), lambda b: (0, 0)),
        ],
        out_specs=pl.BlockSpec((1, S, D), lambda b: (b, 0, 0)),
        compiler_params=pltpu.CompilerParams(
            dimension_semantics=("parallel",),
            vmem_limit_bytes=vmem_limit),
    )(x, w_qkv_t, b_qkv, w_proj_t, b_proj)


def _reference(x, w_qkv_t, b_qkv, w_proj_t, b_proj, num_heads):
    B, S, D = x.shape
    hd = D // num_heads
    qkv = x @ w_qkv_t + b_qkv
    q, k, v = jnp.split(qkv, 3, axis=-1)

    def sp(t):
        return t.reshape(B, S, num_heads, hd).transpose(0, 2, 1, 3)

    q, k, v = sp(q), sp(k), sp(v)
    scores = jnp.einsum('bhqd,bhkd->bhqk', q, k) / math.sqrt(hd)
    attn = jax.nn.softmax(scores, axis=-1)
    out = jnp.einsum('bhqk,bhkd->bhqd', attn, v)
    out = out.transpose(0, 2, 1, 3).reshape(B, S, D)
    return out @ w_proj_t + b_proj


if __name__ == "__main__":
    # Small shapes consistent with the module's forward.
    B, S, D, H = 2, 8, 32, 4

    key = jax.random.PRNGKey(0)
    kx, k1, k2, k3, k4 = jax.random.split(key, 5)

    x = jax.random.normal(kx, (B, S, D), dtype=jnp.float32)

    # nn.Linear-style init (deterministic, synthetic): W ~ U(-1/sqrt(in), 1/sqrt(in))
    bound = 1.0 / math.sqrt(D)
    w_qkv = jax.random.uniform(k1, (3 * D, D), minval=-bound, maxval=bound)   # [out, in]
    b_qkv = jax.random.uniform(k2, (3 * D,), minval=-bound, maxval=bound)
    w_proj = jax.random.uniform(k3, (D, D), minval=-bound, maxval=bound)
    b_proj = jax.random.uniform(k4, (D,), minval=-bound, maxval=bound)

    # Pre-transpose to (in, out) and make biases 2D for TPU-friendly layout.
    w_qkv_t = w_qkv.T                       # (D, 3D)
    b_qkv_2d = b_qkv.reshape(1, 3 * D)
    w_proj_t = w_proj.T                     # (D, D)
    b_proj_2d = b_proj.reshape(1, D)

    out = multi_head_attention(x, w_qkv_t, b_qkv_2d, w_proj_t, b_proj_2d,
                               num_heads=H)
    out = jax.block_until_ready(out)

    ref = _reference(x, w_qkv_t, b_qkv_2d, w_proj_t, b_proj_2d, H)
    assert out.shape == (B, S, D)
    # Tolerance loosened slightly vs v1 because the softmax denominator uses
    # the EUP approximate reciprocal (pl.reciprocal(approx=True)).
    assert jnp.allclose(out, ref, atol=5e-3, rtol=5e-3), "mismatch vs reference"

    print("KERNEL_OK")
</pallas_src>

<mosaic_0001>
module attributes {stable_mosaic.version = 11 : i64} {
  func.func @_mha_kernel(%arg0: i32, %arg1: memref<1x8x32xf32, #tpu.memory_space<vmem>>, %arg2: memref<32x96xf32, #tpu.memory_space<vmem>>, %arg3: memref<1x96xf32, #tpu.memory_space<vmem>>, %arg4: memref<32x32xf32, #tpu.memory_space<vmem>>, %arg5: memref<1x32xf32, #tpu.memory_space<vmem>>, %arg6: memref<1x8x32xf32, #tpu.memory_space<vmem>>) attributes {dimension_semantics = [#tpu.dimension_semantics<parallel>], iteration_bounds = array<i64: 2>, scalar_prefetch = 0 : i64, scratch_operands = 0 : i64, tpu.core_type = #tpu.core_type<tc>, window_params = [{transform_indices = @transform_0, window_bounds = array<i64: 1, 8, 32>}, {pipeline_mode = #tpu.pipeline_mode<synchronous>, transform_indices = @transform_1, window_bounds = array<i64: 32, 96>}, {pipeline_mode = #tpu.pipeline_mode<synchronous>, transform_indices = @transform_2, window_bounds = array<i64: 1, 96>}, {pipeline_mode = #tpu.pipeline_mode<synchronous>, transform_indices = @transform_3, window_bounds = array<i64: 32, 32>}, {pipeline_mode = #tpu.pipeline_mode<synchronous>, transform_indices = @transform_4, window_bounds = array<i64: 1, 32>}, {transform_indices = @transform_5, window_bounds = array<i64: 1, 8, 32>}]} {
    %c0 = arith.constant 0 : index
    %c0_0 = arith.constant 0 : index
    %c0_1 = arith.constant 0 : index
    %0 = vector.load %arg1[%c0, %c0_0, %c0_1] : memref<1x8x32xf32, #tpu.memory_space<vmem>>, vector<1x8x32xf32>
    %1 = vector.shape_cast %0 : vector<1x8x32xf32> to vector<8x32xf32>
    %c0_2 = arith.constant 0 : index
    %c0_3 = arith.constant 0 : index
    %2 = vector.load %arg2[%c0_2, %c0_3] : memref<32x96xf32, #tpu.memory_space<vmem>>, vector<32x96xf32>
    %cst = arith.constant dense<0.000000e+00> : vector<8x96xf32>
    %3 = tpu.matmul %1, %2, %cst {dimension_numbers = #tpu.dot_dimension_numbers<[1], [0], [0], [1], [0, 0, 1, 1], [], []>} : vector<8x32xf32>, vector<32x96xf32>, vector<8x96xf32> -> vector<8x96xf32>
    %c0_4 = arith.constant 0 : index
    %c0_5 = arith.constant 0 : index
    %4 = vector.load %arg3[%c0_4, %c0_5] : memref<1x96xf32, #tpu.memory_space<vmem>>, vector<1x96xf32>
    %5 = vector.broadcast %4 : vector<1x96xf32> to vector<8x96xf32>
    %6 = arith.addf %3, %5 : vector<8x96xf32>
    %7 = vector.extract_strided_slice %6 {offsets = [0, 0], sizes = [8, 32], strides = [1, 1]} : vector<8x96xf32> to vector<8x32xf32>
    %cst_6 = arith.constant 0.353553385 : f32
    %8 = vector.broadcast %cst_6 : f32 to vector<8x32xf32>
    %9 = arith.mulf %7, %8 : vector<8x32xf32>
    %10 = vector.extract_strided_slice %6 {offsets = [0, 32], sizes = [8, 32], strides = [1, 1]} : vector<8x96xf32> to vector<8x32xf32>
    %11 = vector.extract_strided_slice %6 {offsets = [0, 64], sizes = [8, 32], strides = [1, 1]} : vector<8x96xf32> to vector<8x32xf32>
    %c0_7 = arith.constant 0 : index
    %c0_8 = arith.constant 0 : index
    %12 = vector.load %arg4[%c0_7, %c0_8] : memref<32x32xf32, #tpu.memory_space<vmem>>, vector<32x32xf32>
    %c0_9 = arith.constant 0 : index
    %c0_10 = arith.constant 0 : index
    %13 = vector.load %arg5[%c0_9, %c0_10] : memref<1x32xf32, #tpu.memory_space<vmem>>, vector<1x32xf32>
    %14 = vector.extract_strided_slice %9 {offsets = [0, 0], sizes = [8, 8], strides = [1, 1]} : vector<8x32xf32> to vector<8x8xf32>
    %15 = vector.extract_strided_slice %10 {offsets = [0, 0], sizes = [8, 8], strides = [1, 1]} : vector<8x32xf32> to vector<8x8xf32>
    %16 = vector.extract_strided_slice %11 {offsets = [0, 0], sizes = [8, 8], strides = [1, 1]} : vector<8x32xf32> to vector<8x8xf32>
    %cst_11 = arith.constant dense<0.000000e+00> : vector<8x8xf32>
    %17 = tpu.matmul %14, %15, %cst_11 {dimension_numbers = #tpu.dot_dimension_numbers<[1], [1], [0], [0], [0, 0, 1, 0], [], []>} : vector<8x8xf32>, vector<8x8xf32>, vector<8x8xf32> -> vector<8x8xf32>
    %cst_12 = arith.constant dense<0xFF800000> : vector<8xf32>
    %18 = vector.multi_reduction <maximumf>, %17, %cst_12 [1] : vector<8x8xf32> to vector<8xf32>
    %19 = vector.shape_cast %18 : vector<8xf32> to vector<8x1xf32>
    %20 = vector.broadcast %19 : vector<8x1xf32> to vector<8x8xf32>
    %21 = arith.subf %17, %20 : vector<8x8xf32>
    %22 = math.exp %21 : vector<8x8xf32>
    %cst_13 = arith.constant dense<0.000000e+00> : vector<8xf32>
    %23 = vector.multi_reduction <add>, %22, %cst_13 [1] : vector<8x8xf32> to vector<8xf32>
    %24 = vector.shape_cast %23 : vector<8xf32> to vector<8x1xf32>
    %25 = tpu.reciprocal %24 {approx = true} : vector<8x1xf32> -> vector<8x1xf32>
    %cst_14 = arith.constant dense<0.000000e+00> : vector<8x8xf32>
    %26 = tpu.matmul %22, %16, %cst_14 {dimension_numbers = #tpu.dot_dimension_numbers<[1], [0], [0], [1], [0, 0, 1, 1], [], []>} : vector<8x8xf32>, vector<8x8xf32>, vector<8x8xf32> -> vector<8x8xf32>
    %27 = vector.broadcast %25 : vector<8x1xf32> to vector<8x8xf32>
    %28 = arith.mulf %26, %27 : vector<8x8xf32>
    %29 = vector.extract_strided_slice %9 {offsets = [0, 8], sizes = [8, 8], strides = [1, 1]} : vector<8x32xf32> to vector<8x8xf32>
    %30 = vector.extract_strided_slice %10 {offsets = [0, 8], sizes = [8, 8], strides = [1, 1]} : vector<8x32xf32> to vector<8x8xf32>
    %31 = vector.extract_strided_slice %11 {offsets = [0, 8], sizes = [8, 8], strides = [1, 1]} : vector<8x32xf32> to vector<8x8xf32>
    %cst_15 = arith.constant dense<0.000000e+00> : vector<8x8xf32>
    %32 = tpu.matmul %29, %30, %cst_15 {dimension_numbers = #tpu.dot_dimension_numbers<[1], [1], [0], [0], [0, 0, 1, 0], [], []>} : vector<8x8xf32>, vector<8x8xf32>, vector<8x8xf32> -> vector<8x8xf32>
    %cst_16 = arith.constant dense<0xFF800000> : vector<8xf32>
    %33 = vector.multi_reduction <maximumf>, %32, %cst_16 [1] : vector<8x8xf32> to vector<8xf32>
    %34 = vector.shape_cast %33 : vector<8xf32> to vector<8x1xf32>
    %35 = vector.broadcast %34 : vector<8x1xf32> to vector<8x8xf32>
    %36 = arith.subf %32, %35 : vector<8x8xf32>
    %37 = math.exp %36 : vector<8x8xf32>
    %cst_17 = arith.constant dense<0.000000e+00> : vector<8xf32>
    %38 = vector.multi_reduction <add>, %37, %cst_17 [1] : vector<8x8xf32> to vector<8xf32>
    %39 = vector.shape_cast %38 : vector<8xf32> to vector<8x1xf32>
    %40 = tpu.reciprocal %39 {approx = true} : vector<8x1xf32> -> vector<8x1xf32>
    %cst_18 = arith.constant dense<0.000000e+00> : vector<8x8xf32>
    %41 = tpu.matmul %37, %31, %cst_18 {dimension_numbers = #tpu.dot_dimension_numbers<[1], [0], [0], [1], [0, 0, 1, 1], [], []>} : vector<8x8xf32>, vector<8x8xf32>, vector<8x8xf32> -> vector<8x8xf32>
    %42 = vector.broadcast %40 : vector<8x1xf32> to vector<8x8xf32>
    %43 = arith.mulf %41, %42 : vector<8x8xf32>
    %44 = vector.extract_strided_slice %9 {offsets = [0, 16], sizes = [8, 8], strides = [1, 1]} : vector<8x32xf32> to vector<8x8xf32>
    %45 = vector.extract_strided_slice %10 {offsets = [0, 16], sizes = [8, 8], strides = [1, 1]} : vector<8x32xf32> to vector<8x8xf32>
    %46 = vector.extract_strided_slice %11 {offsets = [0, 16], sizes = [8, 8], strides = [1, 1]} : vector<8x32xf32> to vector<8x8xf32>
    %cst_19 = arith.constant dense<0.000000e+00> : vector<8x8xf32>
    %47 = tpu.matmul %44, %45, %cst_19 {dimension_numbers = #tpu.dot_dimension_numbers<[1], [1], [0], [0], [0, 0, 1, 0], [], []>} : vector<8x8xf32>, vector<8x8xf32>, vector<8x8xf32> -> vector<8x8xf32>
    %cst_20 = arith.constant dense<0xFF800000> : vector<8xf32>
    %48 = vector.multi_reduction <maximumf>, %47, %cst_20 [1] : vector<8x8xf32> to vector<8xf32>
    %49 = vector.shape_cast %48 : vector<8xf32> to vector<8x1xf32>
    %50 = vector.broadcast %49 : vector<8x1xf32> to vector<8x8xf32>
    %51 = arith.subf %47, %50 : vector<8x8xf32>
    %52 = math.exp %51 : vector<8x8xf32>
    %cst_21 = arith.constant dense<0.000000e+00> : vector<8xf32>
    %53 = vector.multi_reduction <add>, %52, %cst_21 [1] : vector<8x8xf32> to vector<8xf32>
    %54 = vector.shape_cast %53 : vector<8xf32> to vector<8x1xf32>
    %55 = tpu.reciprocal %54 {approx = true} : vector<8x1xf32> -> vector<8x1xf32>
    %cst_22 = arith.constant dense<0.000000e+00> : vector<8x8xf32>
    %56 = tpu.matmul %52, %46, %cst_22 {dimension_numbers = #tpu.dot_dimension_numbers<[1], [0], [0], [1], [0, 0, 1, 1], [], []>} : vector<8x8xf32>, vector<8x8xf32>, vector<8x8xf32> -> vector<8x8xf32>
    %57 = vector.broadcast %55 : vector<8x1xf32> to vector<8x8xf32>
    %58 = arith.mulf %56, %57 : vector<8x8xf32>
    %59 = vector.extract_strided_slice %9 {offsets = [0, 24], sizes = [8, 8], strides = [1, 1]} : vector<8x32xf32> to vector<8x8xf32>
    %60 = vector.extract_strided_slice %10 {offsets = [0, 24], sizes = [8, 8], strides = [1, 1]} : vector<8x32xf32> to vector<8x8xf32>
    %61 = vector.extract_strided_slice %11 {offsets = [0, 24], sizes = [8, 8], strides = [1, 1]} : vector<8x32xf32> to vector<8x8xf32>
    %cst_23 = arith.constant dense<0.000000e+00> : vector<8x8xf32>
    %62 = tpu.matmul %59, %60, %cst_23 {dimension_numbers = #tpu.dot_dimension_numbers<[1], [1], [0], [0], [0, 0, 1, 0], [], []>} : vector<8x8xf32>, vector<8x8xf32>, vector<8x8xf32> -> vector<8x8xf32>
    %cst_24 = arith.constant dense<0xFF800000> : vector<8xf32>
    %63 = vector.multi_reduction <maximumf>, %62, %cst_24 [1] : vector<8x8xf32> to vector<8xf32>
    %64 = vector.shape_cast %63 : vector<8xf32> to vector<8x1xf32>
    %65 = vector.broadcast %64 : vector<8x1xf32> to vector<8x8xf32>
    %66 = arith.subf %62, %65 : vector<8x8xf32>
    %67 = math.exp %66 : vector<8x8xf32>
    %cst_25 = arith.constant dense<0.000000e+00> : vector<8xf32>
    %68 = vector.multi_reduction <add>, %67, %cst_25 [1] : vector<8x8xf32> to vector<8xf32>
    %69 = vector.shape_cast %68 : vector<8xf32> to vector<8x1xf32>
    %70 = tpu.reciprocal %69 {approx = true} : vector<8x1xf32> -> vector<8x1xf32>
    %cst_26 = arith.constant dense<0.000000e+00> : vector<8x8xf32>
    %71 = tpu.matmul %67, %61, %cst_26 {dimension_numbers = #tpu.dot_dimension_numbers<[1], [0], [0], [1], [0, 0, 1, 1], [], []>} : vector<8x8xf32>, vector<8x8xf32>, vector<8x8xf32> -> vector<8x8xf32>
    %72 = vector.broadcast %70 : vector<8x1xf32> to vector<8x8xf32>
    %73 = arith.mulf %71, %72 : vector<8x8xf32>
    %74 = tpu.concatenate %28, %43, %58, %73 in 1 : vector<8x8xf32>, vector<8x8xf32>, vector<8x8xf32>, vector<8x8xf32> -> vector<8x32xf32>
    %cst_27 = arith.constant dense<0.000000e+00> : vector<8x32xf32>
    %75 = tpu.matmul %74, %12, %cst_27 {dimension_numbers = #tpu.dot_dimension_numbers<[1], [0], [0], [1], [0, 0, 1, 1], [], []>} : vector<8x32xf32>, vector<32x32xf32>, vector<8x32xf32> -> vector<8x32xf32>
    %76 = vector.broadcast %13 : vector<1x32xf32> to vector<8x32xf32>
    %77 = arith.addf %75, %76 : vector<8x32xf32>
    %c0_28 = arith.constant 0 : index
    %c0_29 = arith.constant 0 : index
    %c0_30 = arith.constant 0 : index
    %78 = vector.load %arg6[%c0_28, %c0_29, %c0_30] : memref<1x8x32xf32, #tpu.memory_space<vmem>>, vector<1x8x32xf32>
    %79 = vector.shape_cast %78 : vector<1x8x32xf32> to vector<8x32xf32>
    %80 = vector.shape_cast %77 : vector<8x32xf32> to vector<1x8x32xf32>
    tpu.vector_store %arg6[%c0_28, %c0_29, %c0_30], %80 {strides = array<i32>} : memref<1x8x32xf32, #tpu.memory_space<vmem>>, vector<1x8x32xf32>,
    return
  }
  func.func @transform_0(%arg0: i32) -> (i32, i32, i32) {
    %c0_i32 = arith.constant 0 : i32
    %c0_i32_0 = arith.constant 0 : i32
    %c0_i32_1 = arith.constant 0 : i32
    return %arg0, %c0_i32, %c0_i32_0 : i32, i32, i32
  }
  func.func @transform_1(%arg0: i32) -> (i32, i32) {
    %c0_i32 = arith.constant 0 : i32
    %c0_i32_0 = arith.constant 0 : i32
    %c0_i32_1 = arith.constant 0 : i32
    return %c0_i32, %c0_i32_0 : i32, i32
  }
  func.func @transform_2(%arg0: i32) -> (i32, i32) {
    %c0_i32 = arith.constant 0 : i32
    %c0_i32_0 = arith.constant 0 : i32
    %c0_i32_1 = arith.constant 0 : i32
    return %c0_i32, %c0_i32_0 : i32, i32
  }
  func.func @transform_3(%arg0: i32) -> (i32, i32) {
    %c0_i32 = arith.constant 0 : i32
    %c0_i32_0 = arith.constant 0 : i32
    %c0_i32_1 = arith.constant 0 : i32
    return %c0_i32, %c0_i32_0 : i32, i32
  }
  func.func @transform_4(%arg0: i32) -> (i32, i32) {
    %c0_i32 = arith.constant 0 : i32
    %c0_i32_0 = arith.constant 0 : i32
    %c0_i32_1 = arith.constant 0 : i32
    return %c0_i32, %c0_i32_0 : i32, i32
  }
  func.func @transform_5(%arg0: i32) -> (i32, i32, i32) {
    %c0_i32 = arith.constant 0 : i32
    %c0_i32_0 = arith.constant 0 : i32
    %c0_i32_1 = arith.constant 0 : i32
    return %arg0, %c0_i32, %c0_i32_0 : i32, i32, i32
  }
}

</mosaic_0001>

<llo_original>
// kernel: tpu_custom_call.1
$region0: #{tpu_custom_call.1}
  #allocation0 [shape = 'u32[]', space=smem, size = 0x4, offset = 0x4, fixed_abs, tag = 'smem constant byte address 0x4 - core index']
  #allocation1 [shape = 'u32[144,128]{1,0:T(1,128)}', space=vmem, size = 0x12000, scoped, tag = 'internal scratch']
  %s0 = inlined_call_operand.hbm [shape: f32[2,8,32], index: 0, kind: input, shape index: {}]
  %s1 = inlined_call_operand.hbm [shape: f32[32,96], index: 1, kind: input, shape index: {}]
  %s2 = inlined_call_operand.vmem [shape: f32[1,96], index: 2, kind: input, shape index: {}]
  %s3 = inlined_call_operand.hbm [shape: f32[32,32], index: 3, kind: input, shape index: {}]
  %s4 = inlined_call_operand.vmem [shape: f32[1,32], index: 4, kind: input, shape index: {}]
  %s5 = inlined_call_operand.hbm [shape: f32[2,8,32], index: 5, kind: output, shape index: {}]
  %s6 = sld [smem:[#allocation0]]
  $region65: #{tpu_custom_call.1} parent=0
    _
  %s8 = ssub.s32 1, %s6
  %s9 = scalar_select 0, %s8, %s6
  $region1: #{tpu_custom_call.1} parent=0
    #allocation2 [shape = 'u8[8192]{0}', space=vmem, size = 0x2000, scoped, tag = 'input window, operand 0']
    #allocation3 [shape = 's32[2]{0}', space=sflag, size = 0x8, scoped, tag = 'scoped memory for tpu_custom_call.1']
    #allocation4 [shape = 's32[2]{0}', space=sflag, size = 0x8, scoped, tag = 'scoped memory for tpu_custom_call.1']
    #allocation5 [shape = 'u8[16384]{0}', space=vmem, size = 0x4000, scoped, tag = 'input window, operand 1, single buffered']
    #allocation6 [shape = 's32[1]{0}', space=sflag, size = 0x4, scoped, tag = 'scoped memory for tpu_custom_call.1']
    #allocation7 [shape = 'u8[16384]{0}', space=vmem, size = 0x4000, scoped, tag = 'input window, operand 3, single buffered']
    #allocation8 [shape = 'u8[8192]{0}', space=vmem, size = 0x2000, scoped, tag = 'output window, operand 0']
    %10 = vsyncpa [#allocation3], 0
    %s11 = scalar_lea.sflag [#allocation3], 1
    %12 = vsyncpa %s11, 0
    %13 = vsyncpa [#allocation6], 0
    %14 = vsyncpa [#allocation4], 0
    %s15 = scalar_lea.sflag [#allocation4], 1
    %16 = vsyncpa %s15, 0
    loop: start=0, step=1, limit=4
    $region2: #{tpu_custom_call.1} parent=1 // loop_pre_header
      _
    $region3: #{tpu_custom_call.1} parent=1 // loop_header
      %s18 = sphi 0, %s22
      %p19 = scmp.ge.s32.totalorder %s18, 4
      %s28 = sphi 0, %s30
      %s31 = sphi 0, %s28
      %s32 = sphi 0, %s31
      %s48 = sphi 0, %s32
      %s52 = sphi 0, %s52
      %s54 = sphi 0, %s52
      %s55 = sphi 0, %s54
      %s69 = sphi 0, %s55
      %s73 = sphi 0, %s73
      %s75 = sphi 0, %s73
      %s76 = sphi 0, %s75
      %s90 = sphi 0, %s76
      %s94 = sphi 0, %s94
      %s96 = sphi 0, %s94
      %s97 = sphi 0, %s96
      %s111 = sphi 0, %s97
      %s115 = sphi 0, %s115
      %s117 = sphi 0, %s115
      %s118 = sphi 0, %s117
      %s132 = sphi 0, %s118
      %s138 = sphi 0, %s140
      %s141 = sphi 0, %s138
      %s142 = sphi 0, %s141
      %s158 = sphi 0, %s142
    $region4: #{tpu_custom_call.1} parent=1 // loop_header_branch
      %21 = sbr.rel (%p19) target = $region8
    $region5: #{tpu_custom_call.1} parent=1 // loop_body
      %s23 = ssub.s32 %s18, 1
      %s24 = ssub.s32 %s18, 2
      %s25 = sadd.s32 %s18, 1
      %s26 = ssub.s32 %s18, %s25
      %p27 = scmp.eq.s32.totalorder %s26, 0
      %s29 = sadd.s32 %s28, 1
      %s30 = scalar_select %p27, %s28, %s29
      %p33 = pneg %p27
      %p34 = scmp.eq.s32.totalorder %s18, 1
      %p35 = por %p33, %p34
      %p36 = scmp.ne.s32.totalorder %s28, %s31
      %p37 = scmp.eq.s32.totalorder %s18, 0
      %p38 = por %p36, %p37
      %p39 = scmp.ne.s32.totalorder %s28, %s31
      %p40 = scmp.eq.s32.totalorder %s23, 1
      %p41 = por %p39, %p40
      %p42 = scmp.ne.s32.totalorder %s31, %s32
      %p43 = scmp.eq.s32.totalorder %s23, 0
      %p44 = por %p42, %p43
      %p45 = scmp.ne.s32.totalorder %s31, %s32
      %p46 = scmp.eq.s32.totalorder %s24, 1
      %p47 = por %p45, %p46
      %p49 = scmp.ne.s32.totalorder %s32, %s48
      %p50 = scmp.eq.s32.totalorder %s24, 0
      %p51 = por %p49, %p50
      %s53 = sadd.s32 %s52, 1
      %p56 = scmp.eq.s32.totalorder %s18, 1
      %p57 = scmp.ne.s32.totalorder %s52, %s54
      %p58 = scmp.eq.s32.totalorder %s18, 0
      %p59 = por %p57, %p58
      %p60 = scmp.ne.s32.totalorder %s52, %s54
      %p61 = scmp.eq.s32.totalorder %s23, 1
      %p62 = por %p60, %p61
      %p63 = scmp.ne.s32.totalorder %s54, %s55
      %p64 = scmp.eq.s32.totalorder %s23, 0
      %p65 = por %p63, %p64
      %p66 = scmp.ne.s32.totalorder %s54, %s55
      %p67 = scmp.eq.s32.totalorder %s24, 1
      %p68 = por %p66, %p67
      %p70 = scmp.ne.s32.totalorder %s55, %s69
      %p71 = scmp.eq.s32.totalorder %s24, 0
      %p72 = por %p70, %p71
      %s74 = sadd.s32 %s73, 1
      %p77 = scmp.eq.s32.totalorder %s18, 1
      %p78 = scmp.ne.s32.totalorder %s73, %s75
      %p79 = scmp.eq.s32.totalorder %s18, 0
      %p80 = por %p78, %p79
      %p81 = scmp.ne.s32.totalorder %s73, %s75
      %p82 = scmp.eq.s32.totalorder %s23, 1
      %p83 = por %p81, %p82
      %p84 = scmp.ne.s32.totalorder %s75, %s76
      %p85 = scmp.eq.s32.totalorder %s23, 0
      %p86 = por %p84, %p85
      %p87 = scmp.ne.s32.totalorder %s75, %s76
      %p88 = scmp.eq.s32.totalorder %s24, 1
      %p89 = por %p87, %p88
      %p91 = scmp.ne.s32.totalorder %s76, %s90
      %p92 = scmp.eq.s32.totalorder %s24, 0
      %p93 = por %p91, %p92
      %s95 = sadd.s32 %s94, 1
      %p98 = scmp.eq.s32.totalorder %s18, 1
      %p99 = scmp.ne.s32.totalorder %s94, %s96
      %p100 = scmp.eq.s32.totalorder %s18, 0
      %p101 = por %p99, %p100
      %p102 = scmp.ne.s32.totalorder %s94, %s96
      %p103 = scmp.eq.s32.totalorder %s23, 1
      %p104 = por %p102, %p103
      %p105 = scmp.ne.s32.totalorder %s96, %s97
      %p106 = scmp.eq.s32.totalorder %s23, 0
      %p107 = por %p105, %p106
      %p108 = scmp.ne.s32.totalorder %s96, %s97
      %p109 = scmp.eq.s32.totalorder %s24, 1
      %p110 = por %p108, %p109
      %p112 = scmp.ne.s32.totalorder %s97, %s111
      %p113 = scmp.eq.s32.totalorder %s24, 0
      %p114 = por %p112, %p113
      %s116 = sadd.s32 %s115, 1
      %p119 = scmp.eq.s32.totalorder %s18, 1
      %p120 = scmp.ne.s32.totalorder %s115, %s117
      %p121 = scmp.eq.s32.totalorder %s18, 0
      %p122 = por %p120, %p121
      %p123 = scmp.ne.s32.totalorder %s115, %s117
      %p124 = scmp.eq.s32.totalorder %s23, 1
      %p125 = por %p123, %p124
      %p126 = scmp.ne.s32.totalorder %s117, %s118
      %p127 = scmp.eq.s32.totalorder %s23, 0
      %p128 = por %p126, %p127
      %p129 = scmp.ne.s32.totalorder %s117, %s118
      %p130 = scmp.eq.s32.totalorder %s24, 1
      %p131 = por %p129, %p130
      %p133 = scmp.ne.s32.totalorder %s118, %s132
      %p134 = scmp.eq.s32.totalorder %s24, 0
      %p135 = por %p133, %p134
      %s136 = ssub.s32 %s18, %s25
      %p137 = scmp.eq.s32.totalorder %s136, 0
      %s139 = sadd.s32 %s138, 1
      %s140 = scalar_select %p137, %s138, %s139
      %p143 = pneg %p137
      %p144 = scmp.eq.s32.totalorder %s18, 1
      %p145 = por %p143, %p144
      %p146 = scmp.ne.s32.totalorder %s138, %s141
      %p147 = scmp.eq.s32.totalorder %s18, 0
      %p148 = por %p146, %p147
      %p149 = scmp.ne.s32.totalorder %s138, %s141
      %p150 = scmp.eq.s32.totalorder %s23, 1
      %p151 = por %p149, %p150
      %p152 = scmp.ne.s32.totalorder %s141, %s142
      %p153 = scmp.eq.s32.totalorder %s23, 0
      %p154 = por %p152, %p153
      %p155 = scmp.ne.s32.totalorder %s141, %s142
      %p156 = scmp.eq.s32.totalorder %s24, 1
      %p157 = por %p155, %p156
      %p159 = scmp.ne.s32.totalorder %s142, %s158
      %p160 = scmp.eq.s32.totalorder %s24, 0
      %p161 = por %p159, %p160
      %p162 = scmp.le.s32.totalorder 1, %s18
      %p163 = scmp.lt.s32.totalorder %s18, 3
      %p164 = pnand %p162, %p163
      %p165 = pneg %p164
      // Predicated region
      $region9: #{tpu_custom_call.1} parent=5 // pred_check
        _
      $region10: #{tpu_custom_call.1} parent=5 // pred_check_branch
        %167 = sbr.rel (%p164) target = $region12
      $region11: #{tpu_custom_call.1} parent=5 // pred_region
        %s168 = ssub.s32 %s18, 1
        // Predicated region
        $region13: #{tpu_custom_call.1} parent=11 // pred_check
          %p169 = pneg %p65
        $region14: #{tpu_custom_call.1} parent=11 // pred_check_branch
          %171 = sbr.rel (%p169) target = $region16
        $region15: #{tpu_custom_call.1} parent=11 // pred_region
          %s173 = ssub.s32 512, 512
          %174 = vsyncadd [#allocation6], %s173
          %s175 = sshll.u32 [#allocation5], 4
          %s176 = int_to_ptr.vmem [resolvable:$true] %s175
          %181 = dma.hbm_to_vmem [thread:$0]  %s1, 512, %s176, [#allocation6], 128, 128, 8
        $region16: #{tpu_custom_call.1} parent=11 // pred_fallthru
          _
        // Predicated region
        $region17: #{tpu_custom_call.1} parent=11 // pred_check
          %p182 = pneg %p86
        $region18: #{tpu_custom_call.1} parent=11 // pred_check_branch
          %184 = sbr.rel (%p182) target = $region20
        $region19: #{tpu_custom_call.1} parent=11 // pred_region
          _
        $region20: #{tpu_custom_call.1} parent=11 // pred_fallthru
          _
        // Predicated region
        $region21: #{tpu_custom_call.1} parent=11 // pred_check
          %p185 = pneg %p107
        $region22: #{tpu_custom_call.1} parent=11 // pred_check_branch
          %187 = sbr.rel (%p185) target = $region24
        $region23: #{tpu_custom_call.1} parent=11 // pred_region
          %s189 = ssub.s32 512, 512
          %190 = vsyncadd [#allocation6], %s189
          %s191 = sshll.u32 [#allocation7], 4
          %s192 = int_to_ptr.vmem [resolvable:$true] %s191
          %197 = dma.hbm_to_vmem [thread:$0]  %s3, 512, %s192, [#allocation6], 128, 128, 8
        $region24: #{tpu_custom_call.1} parent=11 // pred_fallthru
          _
        // Predicated region
        $region25: #{tpu_custom_call.1} parent=11 // pred_check
          %p198 = pneg %p128
        $region26: #{tpu_custom_call.1} parent=11 // pred_check_branch
          %200 = sbr.rel (%p198) target = $region28
        $region27: #{tpu_custom_call.1} parent=11 // pred_region
          _
        $region28: #{tpu_custom_call.1} parent=11 // pred_fallthru
          _
      $region12: #{tpu_custom_call.1} parent=5 // pred_fallthru
        _
      %p201 = scmp.lt.s32.totalorder %s18, 2
      // Predicated region
      $region29: #{tpu_custom_call.1} parent=5 // pred_check
        %p202 = pneg %p201
      $region30: #{tpu_custom_call.1} parent=5 // pred_check_branch
        %204 = sbr.rel (%p202) target = $region32
      $region31: #{tpu_custom_call.1} parent=5 // pred_region
        // Predicated region
        $region33: #{tpu_custom_call.1} parent=31 // pred_check
          %p205 = pneg %p38
        $region34: #{tpu_custom_call.1} parent=31 // pred_check_branch
          %207 = sbr.rel (%p205) target = $region36
        $region35: #{tpu_custom_call.1} parent=31 // pred_region
          %s208 = sand.u32 %s28, 1
          %s209 = scalar_lea.sflag [#allocation3], %s208
          %s210 = sand.u32 %s28, 1
          %s211 = smul.addr %s210, 8
          %s212 = scalar_lea.vmem [#allocation2], %s211
          %s214 = ssub.s32 128, 128
          %215 = vsyncadd %s209, %s214
          %s216 = smul.addr %s18, 128
          %s217 = scalar_lea.hbm %s0, %s216
          %s219 = sshll.u32 %s212, 4
          %s220 = int_to_ptr.vmem [resolvable:$true] %s219
          %222 = dma.hbm_to_vmem [thread:$0]  %s217, 128, %s220, %s209
        $region36: #{tpu_custom_call.1} parent=31 // pred_fallthru
          _
      $region32: #{tpu_custom_call.1} parent=5 // pred_fallthru
        _
      %p223 = scmp.le.s32.totalorder 1, %s18
      %p224 = scmp.lt.s32.totalorder %s18, 3
      %p225 = pnand %p223, %p224
      %p226 = pneg %p225
      // Predicated region
      $region37: #{tpu_custom_call.1} parent=5 // pred_check
        _
      $region38: #{tpu_custom_call.1} parent=5 // pred_check_branch
        %228 = sbr.rel (%p225) target = $region40
      $region39: #{tpu_custom_call.1} parent=5 // pred_region
        %s229 = ssub.s32 %s18, 1
        %s230 = sand.u32 %s31, 1
        %s231 = scalar_lea.sflag [#allocation3], %s230
        %s232 = sand.u32 %s31, 1
        %s233 = smul.addr %s232, 8
        %s234 = scalar_lea.vmem [#allocation2], %s233
        // Predicated region
        $region41: #{tpu_custom_call.1} parent=39 // pred_check
          %p235 = pneg %p44
        $region42: #{tpu_custom_call.1} parent=39 // pred_check_branch
          %237 = sbr.rel (%p235) target = $region44
        $region43: #{tpu_custom_call.1} parent=39 // pred_region
          %238 = dma.done %s231, 128
        $region44: #{tpu_custom_call.1} parent=39 // pred_fallthru
          _
        // Predicated region
        $region45: #{tpu_custom_call.1} parent=39 // pred_check
          %p239 = pneg %p65
        $region46: #{tpu_custom_call.1} parent=39 // pred_check_branch
          %241 = sbr.rel (%p239) target = $region48
        $region47: #{tpu_custom_call.1} parent=39 // pred_region
          %242 = dma.done [#allocation6], 512
        $region48: #{tpu_custom_call.1} parent=39 // pred_fallthru
          _
        // Predicated region
        $region49: #{tpu_custom_call.1} parent=39 // pred_check
          %p243 = pneg %p107
        $region50: #{tpu_custom_call.1} parent=39 // pred_check_branch
          %245 = sbr.rel (%p243) target = $region52
        $region51: #{tpu_custom_call.1} parent=39 // pred_region
          %246 = dma.done [#allocation6], 512
        $region52: #{tpu_custom_call.1} parent=39 // pred_fallthru
          _
        %s247 = sand.u32 %s31, 1
        %s248 = scalar_lea.sflag [#allocation3], %s247
        %s249 = sand.u32 %s31, 1
        %s250 = smul.addr %s249, 8
        %s251 = scalar_lea.vmem [#allocation2], %s250
        %p252 = pneg %p44
        %p253 = pneg %p41
        %p254 = pneg %p65
        %p255 = pneg %p62
        %p256 = pneg %p86
        %p257 = pneg %p83
        %p258 = pneg %p107
        %p259 = pneg %p104
        %p260 = pneg %p128
        %p261 = pneg %p125
        %p262 = pneg %p154
        %p263 = pneg %p151
        %s264 = sand.u32 %s141, 1
        %s265 = scalar_lea.sflag [#allocation4], %s264
        %s266 = sand.u32 %s141, 1
        %s267 = smul.addr %s266, 8
        %s268 = scalar_lea.vmem [#allocation8], %s267
        %v269 = vld [vmem:[%s234] sm:$0xff]
        %v270 = vld [vmem:[#allocation5] sm:$0xff]
        %v271 = vld [vmem:[#allocation5 + $0x8] sm:$0xff]
        %v272 = vld [vmem:[#allocation5 + $0x10] sm:$0xff]
        %v273 = vld [vmem:[#allocation5 + $0x18] sm:$0xff]
        %v274 = vld [vmem:[%s2] sm:$0x1]
        %v276 = vlaneseq
        %v277 = vshrl.u32 %v276, 7
        %v278 = vsub.s32 0, %v277
        %v279 = vrot.slane %v274, %v278
        %vm281 = vcmask 261120
        %v283 = vsel %vm281, %v269, 0
        %285 = vmatprep.subr.mxu0 0.0
        %286 = vmatpush1.msra.mxu0 0.0
        %287 = vmatprep.subr.mxu0 0.0
        %288 = vmatpush1.msra.mxu0 0.0
        %289 = vmatprep.subr.mxu0 0.0
        %290 = vmatpush1.msra.mxu0 0.0
        %291 = vmatprep.subr.mxu0 0.0
        %292 = vmatpush1.msra.mxu0 0.0
        %293 = vmatprep.subr.mxu0 0.0
        %294 = vmatpush1.msra.mxu0 0.0
        %295 = vmatprep.subr.mxu0 0.0
        %296 = vmatpush1.msra.mxu0 0.0
        %297 = vmatprep.subr.mxu0 0.0
        %298 = vmatpush1.msra.mxu0 0.0
        %299 = vmatprep.subr.mxu0 0.0
        %300 = vmatpush1.msra.mxu0 0.0
        %301 = vmatprep.subr.mxu0 0.0
        %302 = vmatpush1.msra.mxu0 0.0
        %303 = vmatprep.subr.mxu0 0.0
        %304 = vmatpush1.msra.mxu0 0.0
        %305 = vmatprep.subr.mxu0 0.0
        %306 = vmatpush1.msra.mxu0 0.0
        %307 = vmatprep.subr.mxu0 0.0
        %308 = vmatpush1.msra.mxu0 0.0
        %309 = vmatprep.subr.mxu0 0.0
        %310 = vmatpush1.msra.mxu0 %v273
        %311 = vmatprep.subr.mxu0 0.0
        %312 = vmatpush1.msra.mxu0 %v272
        %313 = vmatprep.subr.mxu0 0.0
        %314 = vmatpush1.msra.mxu0 %v271
        %315 = vmatprep.subr.mxu0 0.0
        %316 = vmatpush1.msra.mxu0 %v270
        %317 = vmatprep.subr.mxu0 0.0
        %318 = vmatpush2.msra.mxu0 0.0
        %319 = vmatprep.subr.mxu0 0.0
        %320 = vmatpush2.msra.mxu0 0.0
        %321 = vmatprep.subr.mxu0 0.0
        %322 = vmatpush2.msra.mxu0 0.0
        %323 = vmatprep.subr.mxu0 0.0
        %324 = vmatpush2.msra.mxu0 0.0
        %325 = vmatprep.subr.mxu0 0.0
        %326 = vmatpush2.msra.mxu0 0.0
        %327 = vmatprep.subr.mxu0 0.0
        %328 = vmatpush2.msra.mxu0 0.0
        %329 = vmatprep.subr.mxu0 0.0
        %330 = vmatpush2.msra.mxu0 0.0
        %331 = vmatprep.subr.mxu0 0.0
        %332 = vmatpush2.msra.mxu0 0.0
        %333 = vmatprep.subr.mxu0 0.0
        %334 = vmatpush2.msra.mxu0 0.0
        %335 = vmatprep.subr.mxu0 0.0
        %336 = vmatpush2.msra.mxu0 0.0
        %337 = vmatprep.subr.mxu0 0.0
        %338 = vmatpush2.msra.mxu0 0.0
        %339 = vmatprep.subr.mxu0 0.0
        %340 = vmatpush2.msra.mxu0 0.0
        %341 = vmatprep.subr.mxu0 0.0
        %342 = vmatpush2.msra.mxu0 0.0
        %343 = vmatprep.subr.mxu0 0.0
        %344 = vmatpush2.msra.mxu0 0.0
        %345 = vmatprep.subr.mxu0 0.0
        %346 = vmatpush2.msra.mxu0 0.0
        %347 = vmatprep.subr.mxu0 0.0
        %348 = vmatpush2.msra.mxu0 0.0
        %349 = vmatprep.mubr.f32.mxu0 0.0
        %350 = vmatmul.mubr.f32.gmra.mxu0 %v283
        %v351 = vpop.f32.mrf.mxu0
        %v352 = vadd.f32 %v279, %v351
        %v353 = vpop.f32.mrf.mxu0
        %354 = vdwg.mxu0
        %v355 = vmul.f32 %v352, 0.35355338
        %v356 = vld [vmem:[#allocation7] sm:$0xff]
        %v357 = vld [vmem:[#allocation7 + $0x8] sm:$0xff]
        %v358 = vld [vmem:[#allocation7 + $0x10] sm:$0xff]
        %v359 = vld [vmem:[#allocation7 + $0x18] sm:$0xff]
        %v360 = vld [vmem:[%s4] sm:$0x1]
        %362 = vrot.lane.b32.xlu0 %v352, 96
        %v363 = vpop.permute.xlu0 %362
        %vm364 = vcmask 64512
        %v366 = vsel %vm364, %v355, 0
        %v368 = vsel %vm364, %v363, 0
        %370 = vmatprep.subr.mxu0 0.0
        %371 = vmatpush1.xpose.msra.mxu0 0.0
        %372 = vmatprep.subr.mxu0 0.0
        %373 = vmatpush1.xpose.msra.mxu0 0.0
        %374 = vmatprep.subr.mxu0 0.0
        %375 = vmatpush1.xpose.msra.mxu0 0.0
        %376 = vmatprep.subr.mxu0 0.0
        %377 = vmatpush1.xpose.msra.mxu0 0.0
        %378 = vmatprep.subr.mxu0 0.0
        %379 = vmatpush1.xpose.msra.mxu0 0.0
        %380 = vmatprep.subr.mxu0 0.0
        %381 = vmatpush1.xpose.msra.mxu0 0.0
        %382 = vmatprep.subr.mxu0 0.0
        %383 = vmatpush1.xpose.msra.mxu0 0.0
        %384 = vmatprep.subr.mxu0 0.0
        %385 = vmatpush1.xpose.msra.mxu0 0.0
        %386 = vmatprep.subr.mxu0 0.0
        %387 = vmatpush1.xpose.msra.mxu0 0.0
        %388 = vmatprep.subr.mxu0 0.0
        %389 = vmatpush1.xpose.msra.mxu0 0.0
        %390 = vmatprep.subr.mxu0 0.0
        %391 = vmatpush1.xpose.msra.mxu0 0.0
        %392 = vmatprep.subr.mxu0 0.0
        %393 = vmatpush1.xpose.msra.mxu0 0.0
        %394 = vmatprep.subr.mxu0 0.0
        %395 = vmatpush1.xpose.msra.mxu0 0.0
        %396 = vmatprep.subr.mxu0 0.0
        %397 = vmatpush1.xpose.msra.mxu0 0.0
        %398 = vmatprep.subr.mxu0 0.0
        %399 = vmatpush1.xpose.msra.mxu0 0.0
        %400 = vmatprep.subr.mxu0 0.0
        %401 = vmatpush1.xpose.msra.mxu0 %v368
        %402 = vmatprep.subr.mxu0 0.0
        %403 = vmatpush2.xpose.msra.mxu0 0.0
        %404 = vmatprep.subr.mxu0 0.0
        %405 = vmatpush2.xpose.msra.mxu0 0.0
        %406 = vmatprep.subr.mxu0 0.0
        %407 = vmatpush2.xpose.msra.mxu0 0.0
        %408 = vmatprep.subr.mxu0 0.0
        %409 = vmatpush2.xpose.msra.mxu0 0.0
        %410 = vmatprep.subr.mxu0 0.0
        %411 = vmatpush2.xpose.msra.mxu0 0.0
        %412 = vmatprep.subr.mxu0 0.0
        %413 = vmatpush2.xpose.msra.mxu0 0.0
        %414 = vmatprep.subr.mxu0 0.0
        %415 = vmatpush2.xpose.msra.mxu0 0.0
        %416 = vmatprep.subr.mxu0 0.0
        %417 = vmatpush2.xpose.msra.mxu0 0.0
        %418 = vmatprep.subr.mxu0 0.0
        %419 = vmatpush2.xpose.msra.mxu0 0.0
        %420 = vmatprep.subr.mxu0 0.0
        %421 = vmatpush2.xpose.msra.mxu0 0.0
        %422 = vmatprep.subr.mxu0 0.0
        %423 = vmatpush2.xpose.msra.mxu0 0.0
        %424 = vmatprep.subr.mxu0 0.0
        %425 = vmatpush2.xpose.msra.mxu0 0.0
        %426 = vmatprep.subr.mxu0 0.0
        %427 = vmatpush2.xpose.msra.mxu0 0.0
        %428 = vmatprep.subr.mxu0 0.0
        %429 = vmatpush2.xpose.msra.mxu0 0.0
        %430 = vmatprep.subr.mxu0 0.0
        %431 = vmatpush2.xpose.msra.mxu0 0.0
        %432 = vmatprep.subr.mxu0 0.0
        %433 = vmatpush2.xpose.msra.mxu0 0.0
        %434 = vmatprep.mubr.f32.mxu0 0.0
        %435 = vmatmul.mubr.f32.gmra.mxu0 %v366
        %v436 = vpop.f32.mrf.mxu0
        %v437 = vadd.f32 0.0, %v436
        %v438 = vpop.f32.mrf.mxu0
        %439 = vdwg.mxu0
        %v440 = vsel %vm364, %v437, -inf
        %441 = vmax.xlane.f32.xlu0 %v440
        %v442 = vpop.xlane.xlu0 %441
        %v443 = vsub.f32 %v437, %v442
        %v444 = vmul.f32 %v443, 1.442695
        %v445 = vpow.pop %v444
        %v446 = vsel %vm364, %v445, 0.0
        %447 = vadd.xlane.f32.xlu0 %v446
        %v448 = vpop.xlane.xlu0 %447
        %v449 = vrcp.pop %v448
        %450 = vrot.lane.b32.xlu0 %v352, 64
        %v451 = vpop.permute.xlu0 %450
        %v454 = vsel %vm364, %v445, 0
        %456 = vmatprep.subr.mxu0 0.0
        %457 = vmatpush1.msra.mxu0 0.0
        %458 = vmatprep.subr.mxu0 0.0
        %459 = vmatpush1.msra.mxu0 0.0
        %460 = vmatprep.subr.mxu0 0.0
        %461 = vmatpush1.msra.mxu0 0.0
        %462 = vmatprep.subr.mxu0 0.0
        %463 = vmatpush1.msra.mxu0 0.0
        %464 = vmatprep.subr.mxu0 0.0
        %465 = vmatpush1.msra.mxu0 0.0
        %466 = vmatprep.subr.mxu0 0.0
        %467 = vmatpush1.msra.mxu0 0.0
        %468 = vmatprep.subr.mxu0 0.0
        %469 = vmatpush1.msra.mxu0 0.0
        %470 = vmatprep.subr.mxu0 0.0
        %471 = vmatpush1.msra.mxu0 0.0
        %472 = vmatprep.subr.mxu0 0.0
        %473 = vmatpush1.msra.mxu0 0.0
        %474 = vmatprep.subr.mxu0 0.0
        %475 = vmatpush1.msra.mxu0 0.0
        %476 = vmatprep.subr.mxu0 0.0
        %477 = vmatpush1.msra.mxu0 0.0
        %478 = vmatprep.subr.mxu0 0.0
        %479 = vmatpush1.msra.mxu0 0.0
        %480 = vmatprep.subr.mxu0 0.0
        %481 = vmatpush1.msra.mxu0 0.0
        %482 = vmatprep.subr.mxu0 0.0
        %483 = vmatpush1.msra.mxu0 0.0
        %484 = vmatprep.subr.mxu0 0.0
        %485 = vmatpush1.msra.mxu0 0.0
        %486 = vmatprep.subr.mxu0 0.0
        %487 = vmatpush1.msra.mxu0 %v451
        %488 = vmatprep.subr.mxu0 0.0
        %489 = vmatpush2.msra.mxu0 0.0
        %490 = vmatprep.subr.mxu0 0.0
        %491 = vmatpush2.msra.mxu0 0.0
        %492 = vmatprep.subr.mxu0 0.0
        %493 = vmatpush2.msra.mxu0 0.0
        %494 = vmatprep.subr.mxu0 0.0
        %495 = vmatpush2.msra.mxu0 0.0
        %496 = vmatprep.subr.mxu0 0.0
        %497 = vmatpush2.msra.mxu0 0.0
        %498 = vmatprep.subr.mxu0 0.0
        %499 = vmatpush2.msra.mxu0 0.0
        %500 = vmatprep.subr.mxu0 0.0
        %501 = vmatpush2.msra.mxu0 0.0
        %502 = vmatprep.subr.mxu0 0.0
        %503 = vmatpush2.msra.mxu0 0.0
        %504 = vmatprep.subr.mxu0 0.0
        %505 = vmatpush2.msra.mxu0 0.0
        %506 = vmatprep.subr.mxu0 0.0
        %507 = vmatpush2.msra.mxu0 0.0
        %508 = vmatprep.subr.mxu0 0.0
        %509 = vmatpush2.msra.mxu0 0.0
        %510 = vmatprep.subr.mxu0 0.0
        %511 = vmatpush2.msra.mxu0 0.0
        %512 = vmatprep.subr.mxu0 0.0
        %513 = vmatpush2.msra.mxu0 0.0
        %514 = vmatprep.subr.mxu0 0.0
        %515 = vmatpush2.msra.mxu0 0.0
        %516 = vmatprep.subr.mxu0 0.0
        %517 = vmatpush2.msra.mxu0 0.0
        %518 = vmatprep.subr.mxu0 0.0
        %519 = vmatpush2.msra.mxu0 0.0
        %520 = vmatprep.mubr.f32.mxu0 0.0
        %521 = vmatmul.mubr.f32.gmra.mxu0 %v454
        %v522 = vpop.f32.mrf.mxu0
        %v523 = vadd.f32 0.0, %v522
        %v524 = vpop.f32.mrf.mxu0
        %525 = vdwg.mxu0
        %v526 = vmul.f32 %v523, %v449
        %527 = vrot.lane.b32.xlu0 %v355, 120
        %v528 = vpop.permute.xlu0 %527
        %529 = vrot.lane.b32.xlu0 %v352, 88
        %v530 = vpop.permute.xlu0 %529
        %v531 = vsel %vm364, %v528, 0
        %v533 = vsel %vm364, %v530, 0
        %535 = vmatprep.subr.mxu0 0.0
        %536 = vmatpush1.xpose.msra.mxu0 0.0
        %537 = vmatprep.subr.mxu0 0.0
        %538 = vmatpush1.xpose.msra.mxu0 0.0
        %539 = vmatprep.subr.mxu0 0.0
        %540 = vmatpush1.xpose.msra.mxu0 0.0
        %541 = vmatprep.subr.mxu0 0.0
        %542 = vmatpush1.xpose.msra.mxu0 0.0
        %543 = vmatprep.subr.mxu0 0.0
        %544 = vmatpush1.xpose.msra.mxu0 0.0
        %545 = vmatprep.subr.mxu0 0.0
        %546 = vmatpush1.xpose.msra.mxu0 0.0
        %547 = vmatprep.subr.mxu0 0.0
        %548 = vmatpush1.xpose.msra.mxu0 0.0
        %549 = vmatprep.subr.mxu0 0.0
        %550 = vmatpush1.xpose.msra.mxu0 0.0
        %551 = vmatprep.subr.mxu0 0.0
        %552 = vmatpush1.xpose.msra.mxu0 0.0
        %553 = vmatprep.subr.mxu0 0.0
        %554 = vmatpush1.xpose.msra.mxu0 0.0
        %555 = vmatprep.subr.mxu0 0.0
        %556 = vmatpush1.xpose.msra.mxu0 0.0
        %557 = vmatprep.subr.mxu0 0.0
        %558 = vmatpush1.xpose.msra.mxu0 0.0
        %559 = vmatprep.subr.mxu0 0.0
        %560 = vmatpush1.xpose.msra.mxu0 0.0
        %561 = vmatprep.subr.mxu0 0.0
        %562 = vmatpush1.xpose.msra.mxu0 0.0
        %563 = vmatprep.subr.mxu0 0.0
        %564 = vmatpush1.xpose.msra.mxu0 0.0
        %565 = vmatprep.subr.mxu0 0.0
        %566 = vmatpush1.xpose.msra.mxu0 %v533
        %567 = vmatprep.subr.mxu0 0.0
        %568 = vmatpush2.xpose.msra.mxu0 0.0
        %569 = vmatprep.subr.mxu0 0.0
        %570 = vmatpush2.xpose.msra.mxu0 0.0
        %571 = vmatprep.subr.mxu0 0.0
        %572 = vmatpush2.xpose.msra.mxu0 0.0
        %573 = vmatprep.subr.mxu0 0.0
        %574 = vmatpush2.xpose.msra.mxu0 0.0
        %575 = vmatprep.subr.mxu0 0.0
        %576 = vmatpush2.xpose.msra.mxu0 0.0
        %577 = vmatprep.subr.mxu0 0.0
        %578 = vmatpush2.xpose.msra.mxu0 0.0
        %579 = vmatprep.subr.mxu0 0.0
        %580 = vmatpush2.xpose.msra.mxu0 0.0
        %581 = vmatprep.subr.mxu0 0.0
        %582 = vmatpush2.xpose.msra.mxu0 0.0
        %583 = vmatprep.subr.mxu0 0.0
        %584 = vmatpush2.xpose.msra.mxu0 0.0
        %585 = vmatprep.subr.mxu0 0.0
        %586 = vmatpush2.xpose.msra.mxu0 0.0
        %587 = vmatprep.subr.mxu0 0.0
        %588 = vmatpush2.xpose.msra.mxu0 0.0
        %589 = vmatprep.subr.mxu0 0.0
        %590 = vmatpush2.xpose.msra.mxu0 0.0
        %591 = vmatprep.subr.mxu0 0.0
        %592 = vmatpush2.xpose.msra.mxu0 0.0
        %593 = vmatprep.subr.mxu0 0.0
        %594 = vmatpush2.xpose.msra.mxu0 0.0
        %595 = vmatprep.subr.mxu0 0.0
        %596 = vmatpush2.xpose.msra.mxu0 0.0
        %597 = vmatprep.subr.mxu0 0.0
        %598 = vmatpush2.xpose.msra.mxu0 0.0
        %599 = vmatprep.mubr.f32.mxu0 0.0
        %600 = vmatmul.mubr.f32.gmra.mxu0 %v531
        %v601 = vpop.f32.mrf.mxu0
        %v602 = vadd.f32 0.0, %v601
        %v603 = vpop.f32.mrf.mxu0
        %604 = vdwg.mxu0
        %v605 = vsel %vm364, %v602, -inf
        %606 = vmax.xlane.f32.xlu0 %v605
        %v607 = vpop.xlane.xlu0 %606
        %v608 = vsub.f32 %v602, %v607
        %v609 = vmul.f32 %v608, 1.442695
        %v610 = vpow.pop %v609
        %v611 = vsel %vm364, %v610, 0.0
        %612 = vadd.xlane.f32.xlu0 %v611
        %v613 = vpop.xlane.xlu0 %612
        %v614 = vrcp.pop %v613
        %615 = vrot.lane.b32.xlu0 %v352, 56
        %v616 = vpop.permute.xlu0 %615
        %v619 = vsel %vm364, %v610, 0
        %621 = vmatprep.subr.mxu0 0.0
        %622 = vmatpush1.msra.mxu0 0.0
        %623 = vmatprep.subr.mxu0 0.0
        %624 = vmatpush1.msra.mxu0 0.0
        %625 = vmatprep.subr.mxu0 0.0
        %626 = vmatpush1.msra.mxu0 0.0
        %627 = vmatprep.subr.mxu0 0.0
        %628 = vmatpush1.msra.mxu0 0.0
        %629 = vmatprep.subr.mxu0 0.0
        %630 = vmatpush1.msra.mxu0 0.0
        %631 = vmatprep.subr.mxu0 0.0
        %632 = vmatpush1.msra.mxu0 0.0
        %633 = vmatprep.subr.mxu0 0.0
        %634 = vmatpush1.msra.mxu0 0.0
        %635 = vmatprep.subr.mxu0 0.0
        %636 = vmatpush1.msra.mxu0 0.0
        %637 = vmatprep.subr.mxu0 0.0
        %638 = vmatpush1.msra.mxu0 0.0
        %639 = vmatprep.subr.mxu0 0.0
        %640 = vmatpush1.msra.mxu0 0.0
        %641 = vmatprep.subr.mxu0 0.0
        %642 = vmatpush1.msra.mxu0 0.0
        %643 = vmatprep.subr.mxu0 0.0
        %644 = vmatpush1.msra.mxu0 0.0
        %645 = vmatprep.subr.mxu0 0.0
        %646 = vmatpush1.msra.mxu0 0.0
        %647 = vmatprep.subr.mxu0 0.0
        %648 = vmatpush1.msra.mxu0 0.0
        %649 = vmatprep.subr.mxu0 0.0
        %650 = vmatpush1.msra.mxu0 0.0
        %651 = vmatprep.subr.mxu0 0.0
        %652 = vmatpush1.msra.mxu0 %v616
        %653 = vmatprep.subr.mxu0 0.0
        %654 = vmatpush2.msra.mxu0 0.0
        %655 = vmatprep.subr.mxu0 0.0
        %656 = vmatpush2.msra.mxu0 0.0
        %657 = vmatprep.subr.mxu0 0.0
        %658 = vmatpush2.msra.mxu0 0.0
        %659 = vmatprep.subr.mxu0 0.0
        %660 = vmatpush2.msra.mxu0 0.0
        %661 = vmatprep.subr.mxu0 0.0
        %662 = vmatpush2.msra.mxu0 0.0
        %663 = vmatprep.subr.mxu0 0.0
        %664 = vmatpush2.msra.mxu0 0.0
        %665 = vmatprep.subr.mxu0 0.0
        %666 = vmatpush2.msra.mxu0 0.0
        %667 = vmatprep.subr.mxu0 0.0
        %668 = vmatpush2.msra.mxu0 0.0
        %669 = vmatprep.subr.mxu0 0.0
        %670 = vmatpush2.msra.mxu0 0.0
        %671 = vmatprep.subr.mxu0 0.0
        %672 = vmatpush2.msra.mxu0 0.0
        %673 = vmatprep.subr.mxu0 0.0
        %674 = vmatpush2.msra.mxu0 0.0
        %675 = vmatprep.subr.mxu0 0.0
        %676 = vmatpush2.msra.mxu0 0.0
        %677 = vmatprep.subr.mxu0 0.0
        %678 = vmatpush2.msra.mxu0 0.0
        %679 = vmatprep.subr.mxu0 0.0
        %680 = vmatpush2.msra.mxu0 0.0
        %681 = vmatprep.subr.mxu0 0.0
        %682 = vmatpush2.msra.mxu0 0.0
        %683 = vmatprep.subr.mxu0 0.0
        %684 = vmatpush2.msra.mxu0 0.0
        %685 = vmatprep.mubr.f32.mxu0 0.0
        %686 = vmatmul.mubr.f32.gmra.mxu0 %v619
        %v687 = vpop.f32.mrf.mxu0
        %v688 = vadd.f32 0.0, %v687
        %v689 = vpop.f32.mrf.mxu0
        %690 = vdwg.mxu0
        %v691 = vmul.f32 %v688, %v614
        %692 = vrot.lane.b32.xlu0 %v355, 112
        %v693 = vpop.permute.xlu0 %692
        %694 = vrot.lane.b32.xlu0 %v352, 80
        %v695 = vpop.permute.xlu0 %694
        %v696 = vsel %vm364, %v693, 0
        %v698 = vsel %vm364, %v695, 0
        %700 = vmatprep.subr.mxu0 0.0
        %701 = vmatpush1.xpose.msra.mxu0 0.0
        %702 = vmatprep.subr.mxu0 0.0
        %703 = vmatpush1.xpose.msra.mxu0 0.0
        %704 = vmatprep.subr.mxu0 0.0
        %705 = vmatpush1.xpose.msra.mxu0 0.0
        %706 = vmatprep.subr.mxu0 0.0
        %707 = vmatpush1.xpose.msra.mxu0 0.0
        %708 = vmatprep.subr.mxu0 0.0
        %709 = vmatpush1.xpose.msra.mxu0 0.0
        %710 = vmatprep.subr.mxu0 0.0
        %711 = vmatpush1.xpose.msra.mxu0 0.0
        %712 = vmatprep.subr.mxu0 0.0
        %713 = vmatpush1.xpose.msra.mxu0 0.0
        %714 = vmatprep.subr.mxu0 0.0
        %715 = vmatpush1.xpose.msra.mxu0 0.0
        %716 = vmatprep.subr.mxu0 0.0
        %717 = vmatpush1.xpose.msra.mxu0 0.0
        %718 = vmatprep.subr.mxu0 0.0
        %719 = vmatpush1.xpose.msra.mxu0 0.0
        %720 = vmatprep.subr.mxu0 0.0
        %721 = vmatpush1.xpose.msra.mxu0 0.0
        %722 = vmatprep.subr.mxu0 0.0
        %723 = vmatpush1.xpose.msra.mxu0 0.0
        %724 = vmatprep.subr.mxu0 0.0
        %725 = vmatpush1.xpose.msra.mxu0 0.0
        %726 = vmatprep.subr.mxu0 0.0
        %727 = vmatpush1.xpose.msra.mxu0 0.0
        %728 = vmatprep.subr.mxu0 0.0
        %729 = vmatpush1.xpose.msra.mxu0 0.0
        %730 = vmatprep.subr.mxu0 0.0
        %731 = vmatpush1.xpose.msra.mxu0 %v698
        %732 = vmatprep.subr.mxu0 0.0
        %733 = vmatpush2.xpose.msra.mxu0 0.0
        %734 = vmatprep.subr.mxu0 0.0
        %735 = vmatpush2.xpose.msra.mxu0 0.0
        %736 = vmatprep.subr.mxu0 0.0
        %737 = vmatpush2.xpose.msra.mxu0 0.0
        %738 = vmatprep.subr.mxu0 0.0
        %739 = vmatpush2.xpose.msra.mxu0 0.0
        %740 = vmatprep.subr.mxu0 0.0
        %741 = vmatpush2.xpose.msra.mxu0 0.0
        %742 = vmatprep.subr.mxu0 0.0
        %743 = vmatpush2.xpose.msra.mxu0 0.0
        %744 = vmatprep.subr.mxu0 0.0
        %745 = vmatpush2.xpose.msra.mxu0 0.0
        %746 = vmatprep.subr.mxu0 0.0
        %747 = vmatpush2.xpose.msra.mxu0 0.0
        %748 = vmatprep.subr.mxu0 0.0
        %749 = vmatpush2.xpose.msra.mxu0 0.0
        %750 = vmatprep.subr.mxu0 0.0
        %751 = vmatpush2.xpose.msra.mxu0 0.0
        %752 = vmatprep.subr.mxu0 0.0
        %753 = vmatpush2.xpose.msra.mxu0 0.0
        %754 = vmatprep.subr.mxu0 0.0
        %755 = vmatpush2.xpose.msra.mxu0 0.0
        %756 = vmatprep.subr.mxu0 0.0
        %757 = vmatpush2.xpose.msra.mxu0 0.0
        %758 = vmatprep.subr.mxu0 0.0
        %759 = vmatpush2.xpose.msra.mxu0 0.0
        %760 = vmatprep.subr.mxu0 0.0
        %761 = vmatpush2.xpose.msra.mxu0 0.0
        %762 = vmatprep.subr.mxu0 0.0
        %763 = vmatpush2.xpose.msra.mxu0 0.0
        %764 = vmatprep.mubr.f32.mxu0 0.0
        %765 = vmatmul.mubr.f32.gmra.mxu0 %v696
        %v766 = vpop.f32.mrf.mxu0
        %v767 = vadd.f32 0.0, %v766
        %v768 = vpop.f32.mrf.mxu0
        %769 = vdwg.mxu0
        %v770 = vsel %vm364, %v767, -inf
        %771 = vmax.xlane.f32.xlu0 %v770
        %v772 = vpop.xlane.xlu0 %771
        %v773 = vsub.f32 %v767, %v772
        %v774 = vmul.f32 %v773, 1.442695
        %v775 = vpow.pop %v774
        %v776 = vsel %vm364, %v775, 0.0
        %777 = vadd.xlane.f32.xlu0 %v776
        %v778 = vpop.xlane.xlu0 %777
        %v779 = vrcp.pop %v778
        %780 = vrot.lane.b32.xlu0 %v352, 48
        %v781 = vpop.permute.xlu0 %780
        %v784 = vsel %vm364, %v775, 0
        %786 = vmatprep.subr.mxu0 0.0
        %787 = vmatpush1.msra.mxu0 0.0
        %788 = vmatprep.subr.mxu0 0.0
        %789 = vmatpush1.msra.mxu0 0.0
        %790 = vmatprep.subr.mxu0 0.0
        %791 = vmatpush1.msra.mxu0 0.0
        %792 = vmatprep.subr.mxu0 0.0
        %793 = vmatpush1.msra.mxu0 0.0
        %794 = vmatprep.subr.mxu0 0.0
        %795 = vmatpush1.msra.mxu0 0.0
        %796 = vmatprep.subr.mxu0 0.0
        %797 = vmatpush1.msra.mxu0 0.0
        %798 = vmatprep.subr.mxu0 0.0
        %799 = vmatpush1.msra.mxu0 0.0
        %800 = vmatprep.subr.mxu0 0.0
        %801 = vmatpush1.msra.mxu0 0.0
        %802 = vmatprep.subr.mxu0 0.0
        %803 = vmatpush1.msra.mxu0 0.0
        %804 = vmatprep.subr.mxu0 0.0
        %805 = vmatpush1.msra.mxu0 0.0
        %806 = vmatprep.subr.mxu0 0.0
        %807 = vmatpush1.msra.mxu0 0.0
        %808 = vmatprep.subr.mxu0 0.0
        %809 = vmatpush1.msra.mxu0 0.0
        %810 = vmatprep.subr.mxu0 0.0
        %811 = vmatpush1.msra.mxu0 0.0
        %812 = vmatprep.subr.mxu0 0.0
        %813 = vmatpush1.msra.mxu0 0.0
        %814 = vmatprep.subr.mxu0 0.0
        %815 = vmatpush1.msra.mxu0 0.0
        %816 = vmatprep.subr.mxu0 0.0
        %817 = vmatpush1.msra.mxu0 %v781
        %818 = vmatprep.subr.mxu0 0.0
        %819 = vmatpush2.msra.mxu0 0.0
        %820 = vmatprep.subr.mxu0 0.0
        %821 = vmatpush2.msra.mxu0 0.0
        %822 = vmatprep.subr.mxu0 0.0
        %823 = vmatpush2.msra.mxu0 0.0
        %824 = vmatprep.subr.mxu0 0.0
        %825 = vmatpush2.msra.mxu0 0.0
        %826 = vmatprep.subr.mxu0 0.0
        %827 = vmatpush2.msra.mxu0 0.0
        %828 = vmatprep.subr.mxu0 0.0
        %829 = vmatpush2.msra.mxu0 0.0
        %830 = vmatprep.subr.mxu0 0.0
        %831 = vmatpush2.msra.mxu0 0.0
        %832 = vmatprep.subr.mxu0 0.0
        %833 = vmatpush2.msra.mxu0 0.0
        %834 = vmatprep.subr.mxu0 0.0
        %835 = vmatpush2.msra.mxu0 0.0
        %836 = vmatprep.subr.mxu0 0.0
        %837 = vmatpush2.msra.mxu0 0.0
        %838 = vmatprep.subr.mxu0 0.0
        %839 = vmatpush2.msra.mxu0 0.0
        %840 = vmatprep.subr.mxu0 0.0
        %841 = vmatpush2.msra.mxu0 0.0
        %842 = vmatprep.subr.mxu0 0.0
        %843 = vmatpush2.msra.mxu0 0.0
        %844 = vmatprep.subr.mxu0 0.0
        %845 = vmatpush2.msra.mxu0 0.0
        %846 = vmatprep.subr.mxu0 0.0
        %847 = vmatpush2.msra.mxu0 0.0
        %848 = vmatprep.subr.mxu0 0.0
        %849 = vmatpush2.msra.mxu0 0.0
        %850 = vmatprep.mubr.f32.mxu0 0.0
        %851 = vmatmul.mubr.f32.gmra.mxu0 %v784
        %v852 = vpop.f32.mrf.mxu0
        %v853 = vadd.f32 0.0, %v852
        %v854 = vpop.f32.mrf.mxu0
        %855 = vdwg.mxu0
        %v856 = vmul.f32 %v853, %v779
        %857 = vrot.lane.b32.xlu0 %v355, 104
        %v858 = vpop.permute.xlu0 %857
        %859 = vrot.lane.b32.xlu0 %v352, 72
        %v860 = vpop.permute.xlu0 %859
        %v861 = vsel %vm364, %v858, 0
        %v863 = vsel %vm364, %v860, 0
        %865 = vmatprep.subr.mxu0 0.0
        %866 = vmatpush1.xpose.msra.mxu0 0.0
        %867 = vmatprep.subr.mxu0 0.0
        %868 = vmatpush1.xpose.msra.mxu0 0.0
        %869 = vmatprep.subr.mxu0 0.0
        %870 = vmatpush1.xpose.msra.mxu0 0.0
        %871 = vmatprep.subr.mxu0 0.0
        %872 = vmatpush1.xpose.msra.mxu0 0.0
        %873 = vmatprep.subr.mxu0 0.0
        %874 = vmatpush1.xpose.msra.mxu0 0.0
        %875 = vmatprep.subr.mxu0 0.0
        %876 = vmatpush1.xpose.msra.mxu0 0.0
        %877 = vmatprep.subr.mxu0 0.0
        %878 = vmatpush1.xpose.msra.mxu0 0.0
        %879 = vmatprep.subr.mxu0 0.0
        %880 = vmatpush1.xpose.msra.mxu0 0.0
        %881 = vmatprep.subr.mxu0 0.0
        %882 = vmatpush1.xpose.msra.mxu0 0.0
        %883 = vmatprep.subr.mxu0 0.0
        %884 = vmatpush1.xpose.msra.mxu0 0.0
        %885 = vmatprep.subr.mxu0 0.0
        %886 = vmatpush1.xpose.msra.mxu0 0.0
        %887 = vmatprep.subr.mxu0 0.0
        %888 = vmatpush1.xpose.msra.mxu0 0.0
        %889 = vmatprep.subr.mxu0 0.0
        %890 = vmatpush1.xpose.msra.mxu0 0.0
        %891 = vmatprep.subr.mxu0 0.0
        %892 = vmatpush1.xpose.msra.mxu0 0.0
        %893 = vmatprep.subr.mxu0 0.0
        %894 = vmatpush1.xpose.msra.mxu0 0.0
        %895 = vmatprep.subr.mxu0 0.0
        %896 = vmatpush1.xpose.msra.mxu0 %v863
        %897 = vmatprep.subr.mxu0 0.0
        %898 = vmatpush2.xpose.msra.mxu0 0.0
        %899 = vmatprep.subr.mxu0 0.0
        %900 = vmatpush2.xpose.msra.mxu0 0.0
        %901 = vmatprep.subr.mxu0 0.0
        %902 = vmatpush2.xpose.msra.mxu0 0.0
        %903 = vmatprep.subr.mxu0 0.0
        %904 = vmatpush2.xpose.msra.mxu0 0.0
        %905 = vmatprep.subr.mxu0 0.0
        %906 = vmatpush2.xpose.msra.mxu0 0.0
        %907 = vmatprep.subr.mxu0 0.0
        %908 = vmatpush2.xpose.msra.mxu0 0.0
        %909 = vmatprep.subr.mxu0 0.0
        %910 = vmatpush2.xpose.msra.mxu0 0.0
        %911 = vmatprep.subr.mxu0 0.0
        %912 = vmatpush2.xpose.msra.mxu0 0.0
        %913 = vmatprep.subr.mxu0 0.0
        %914 = vmatpush2.xpose.msra.mxu0 0.0
        %915 = vmatprep.subr.mxu0 0.0
        %916 = vmatpush2.xpose.msra.mxu0 0.0
        %917 = vmatprep.subr.mxu0 0.0
        %918 = vmatpush2.xpose.msra.mxu0 0.0
        %919 = vmatprep.subr.mxu0 0.0
        %920 = vmatpush2.xpose.msra.mxu0 0.0
        %921 = vmatprep.subr.mxu0 0.0
        %922 = vmatpush2.xpose.msra.mxu0 0.0
        %923 = vmatprep.subr.mxu0 0.0
        %924 = vmatpush2.xpose.msra.mxu0 0.0
        %925 = vmatprep.subr.mxu0 0.0
        %926 = vmatpush2.xpose.msra.mxu0 0.0
        %927 = vmatprep.subr.mxu0 0.0
        %928 = vmatpush2.xpose.msra.mxu0 0.0
        %929 = vmatprep.mubr.f32.mxu0 0.0
        %930 = vmatmul.mubr.f32.gmra.mxu0 %v861
        %v931 = vpop.f32.mrf.mxu0
        %v932 = vadd.f32 0.0, %v931
        %v933 = vpop.f32.mrf.mxu0
        %934 = vdwg.mxu0
        %v935 = vsel %vm364, %v932, -inf
        %936 = vmax.xlane.f32.xlu0 %v935
        %v937 = vpop.xlane.xlu0 %936
        %v938 = vsub.f32 %v932, %v937
        %v939 = vmul.f32 %v938, 1.442695
        %v940 = vpow.pop %v939
        %v941 = vsel %vm364, %v940, 0.0
        %942 = vadd.xlane.f32.xlu0 %v941
        %v943 = vpop.xlane.xlu0 %942
        %v944 = vrcp.pop %v943
        %945 = vrot.lane.b32.xlu0 %v352, 40
        %v946 = vpop.permute.xlu0 %945
        %v949 = vsel %vm364, %v940, 0
        %951 = vmatprep.subr.mxu0 0.0
        %952 = vmatpush1.msra.mxu0 0.0
        %953 = vmatprep.subr.mxu0 0.0
        %954 = vmatpush1.msra.mxu0 0.0
        %955 = vmatprep.subr.mxu0 0.0
        %956 = vmatpush1.msra.mxu0 0.0
        %957 = vmatprep.subr.mxu0 0.0
        %958 = vmatpush1.msra.mxu0 0.0
        %959 = vmatprep.subr.mxu0 0.0
        %960 = vmatpush1.msra.mxu0 0.0
        %961 = vmatprep.subr.mxu0 0.0
        %962 = vmatpush1.msra.mxu0 0.0
        %963 = vmatprep.subr.mxu0 0.0
        %964 = vmatpush1.msra.mxu0 0.0
        %965 = vmatprep.subr.mxu0 0.0
        %966 = vmatpush1.msra.mxu0 0.0
        %967 = vmatprep.subr.mxu0 0.0
        %968 = vmatpush1.msra.mxu0 0.0
        %969 = vmatprep.subr.mxu0 0.0
        %970 = vmatpush1.msra.mxu0 0.0
        %971 = vmatprep.subr.mxu0 0.0
        %972 = vmatpush1.msra.mxu0 0.0
        %973 = vmatprep.subr.mxu0 0.0
        %974 = vmatpush1.msra.mxu0 0.0
        %975 = vmatprep.subr.mxu0 0.0
        %976 = vmatpush1.msra.mxu0 0.0
        %977 = vmatprep.subr.mxu0 0.0
        %978 = vmatpush1.msra.mxu0 0.0
        %979 = vmatprep.subr.mxu0 0.0
        %980 = vmatpush1.msra.mxu0 0.0
        %981 = vmatprep.subr.mxu0 0.0
        %982 = vmatpush1.msra.mxu0 %v946
        %983 = vmatprep.subr.mxu0 0.0
        %984 = vmatpush2.msra.mxu0 0.0
        %985 = vmatprep.subr.mxu0 0.0
        %986 = vmatpush2.msra.mxu0 0.0
        %987 = vmatprep.subr.mxu0 0.0
        %988 = vmatpush2.msra.mxu0 0.0
        %989 = vmatprep.subr.mxu0 0.0
        %990 = vmatpush2.msra.mxu0 0.0
        %991 = vmatprep.subr.mxu0 0.0
        %992 = vmatpush2.msra.mxu0 0.0
        %993 = vmatprep.subr.mxu0 0.0
        %994 = vmatpush2.msra.mxu0 0.0
        %995 = vmatprep.subr.mxu0 0.0
        %996 = vmatpush2.msra.mxu0 0.0
        %997 = vmatprep.subr.mxu0 0.0
        %998 = vmatpush2.msra.mxu0 0.0
        %999 = vmatprep.subr.mxu0 0.0
        %1000 = vmatpush2.msra.mxu0 0.0
        %1001 = vmatprep.subr.mxu0 0.0
        %1002 = vmatpush2.msra.mxu0 0.0
        %1003 = vmatprep.subr.mxu0 0.0
        %1004 = vmatpush2.msra.mxu0 0.0
        %1005 = vmatprep.subr.mxu0 0.0
        %1006 = vmatpush2.msra.mxu0 0.0
        %1007 = vmatprep.subr.mxu0 0.0
        %1008 = vmatpush2.msra.mxu0 0.0
        %1009 = vmatprep.subr.mxu0 0.0
        %1010 = vmatpush2.msra.mxu0 0.0
        %1011 = vmatprep.subr.mxu0 0.0
        %1012 = vmatpush2.msra.mxu0 0.0
        %1013 = vmatprep.subr.mxu0 0.0
        %1014 = vmatpush2.msra.mxu0 0.0
        %1015 = vmatprep.mubr.f32.mxu0 0.0
        %1016 = vmatmul.mubr.f32.gmra.mxu0 %v949
        %v1017 = vpop.f32.mrf.mxu0
        %v1018 = vadd.f32 0.0, %v1017
        %v1019 = vpop.f32.mrf.mxu0
        %1020 = vdwg.mxu0
        %v1021 = vmul.f32 %v1018, %v944
        %1023 = vrot.lane.b32.xlu0 %v691, 8
        %v1024 = vpop.permute.xlu0 %1023
        %1027 = vrot.lane.b32.xlu0 %v856, 16
        %v1028 = vpop.permute.xlu0 %1027
        %1031 = vrot.lane.b32.xlu0 %v1021, 24
        %v1032 = vpop.permute.xlu0 %1031
        %v1034 = vsel %vm364, %v526, %v1024
        %vm1035 = vcmask 130048
        %v1036 = vsel %vm1035, %v1034, %v1028
        %vm1037 = vcmask 195584
        %v1038 = vsel %vm1037, %v1036, %v1032
        %v1040 = vlaneseq
        %v1041 = vshrl.u32 %v1040, 7
        %v1042 = vsub.s32 0, %v1041
        %v1043 = vrot.slane %v360, %v1042
        %v1046 = vsel %vm281, %v1038, 0
        %1048 = vmatprep.subr.mxu0 0.0
        %1049 = vmatpush1.msra.mxu0 0.0
        %1050 = vmatprep.subr.mxu0 0.0
        %1051 = vmatpush1.msra.mxu0 0.0
        %1052 = vmatprep.subr.mxu0 0.0
        %1053 = vmatpush1.msra.mxu0 0.0
        %1054 = vmatprep.subr.mxu0 0.0
        %1055 = vmatpush1.msra.mxu0 0.0
        %1056 = vmatprep.subr.mxu0 0.0
        %1057 = vmatpush1.msra.mxu0 0.0
        %1058 = vmatprep.subr.mxu0 0.0
        %1059 = vmatpush1.msra.mxu0 0.0
        %1060 = vmatprep.subr.mxu0 0.0
        %1061 = vmatpush1.msra.mxu0 0.0
        %1062 = vmatprep.subr.mxu0 0.0
        %1063 = vmatpush1.msra.mxu0 0.0
        %1064 = vmatprep.subr.mxu0 0.0
        %1065 = vmatpush1.msra.mxu0 0.0
        %1066 = vmatprep.subr.mxu0 0.0
        %1067 = vmatpush1.msra.mxu0 0.0
        %1068 = vmatprep.subr.mxu0 0.0
        %1069 = vmatpush1.msra.mxu0 0.0
        %1070 = vmatprep.subr.mxu0 0.0
        %1071 = vmatpush1.msra.mxu0 0.0
        %1072 = vmatprep.subr.mxu0 0.0
        %1073 = vmatpush1.msra.mxu0 %v359
        %1074 = vmatprep.subr.mxu0 0.0
        %1075 = vmatpush1.msra.mxu0 %v358
        %1076 = vmatprep.subr.mxu0 0.0
        %1077 = vmatpush1.msra.mxu0 %v357
        %1078 = vmatprep.subr.mxu0 0.0
        %1079 = vmatpush1.msra.mxu0 %v356
        %1080 = vmatprep.subr.mxu0 0.0
        %1081 = vmatpush2.msra.mxu0 0.0
        %1082 = vmatprep.subr.mxu0 0.0
        %1083 = vmatpush2.msra.mxu0 0.0
        %1084 = vmatprep.subr.mxu0 0.0
        %1085 = vmatpush2.msra.mxu0 0.0
        %1086 = vmatprep.subr.mxu0 0.0
        %1087 = vmatpush2.msra.mxu0 0.0
        %1088 = vmatprep.subr.mxu0 0.0
        %1089 = vmatpush2.msra.mxu0 0.0
        %1090 = vmatprep.subr.mxu0 0.0
        %1091 = vmatpush2.msra.mxu0 0.0
        %1092 = vmatprep.subr.mxu0 0.0
        %1093 = vmatpush2.msra.mxu0 0.0
        %1094 = vmatprep.subr.mxu0 0.0
        %1095 = vmatpush2.msra.mxu0 0.0
        %1096 = vmatprep.subr.mxu0 0.0
        %1097 = vmatpush2.msra.mxu0 0.0
        %1098 = vmatprep.subr.mxu0 0.0
        %1099 = vmatpush2.msra.mxu0 0.0
        %1100 = vmatprep.subr.mxu0 0.0
        %1101 = vmatpush2.msra.mxu0 0.0
        %1102 = vmatprep.subr.mxu0 0.0
        %1103 = vmatpush2.msra.mxu0 0.0
        %1104 = vmatprep.subr.mxu0 0.0
        %1105 = vmatpush2.msra.mxu0 0.0
        %1106 = vmatprep.subr.mxu0 0.0
        %1107 = vmatpush2.msra.mxu0 0.0
        %1108 = vmatprep.subr.mxu0 0.0
        %1109 = vmatpush2.msra.mxu0 0.0
        %1110 = vmatprep.subr.mxu0 0.0
        %1111 = vmatpush2.msra.mxu0 0.0
        %1112 = vmatprep.mubr.f32.mxu0 0.0
        %1113 = vmatmul.mubr.f32.gmra.mxu0 %v1046
        %v1114 = vpop.f32.mrf.mxu0
        %v1115 = vadd.f32 %v1043, %v1114
        %v1116 = vpop.f32.mrf.mxu0
        %1117 = vdwg.mxu0
        %1118 = vst.msk [vmem:[%s268] sm:$0xff] %vm281, %v1115
        %s1119 = sand.u32 %s141, 1
        %s1120 = scalar_lea.sflag [#allocation4], %s1119
        %s1121 = sand.u32 %s141, 1
        %s1122 = smul.addr %s1121, 8
        %s1123 = scalar_lea.vmem [#allocation8], %s1122
        // Predicated region
        $region53: #{tpu_custom_call.1} parent=39 // pred_check
          %p1124 = pneg %p151
        $region54: #{tpu_custom_call.1} parent=39 // pred_check_branch
          %1126 = sbr.rel (%p1124) target = $region56
        $region55: #{tpu_custom_call.1} parent=39 // pred_region
          %s1128 = ssub.s32 128, 128
          %1129 = vsyncadd %s1120, %s1128
          %s1130 = smul.addr %s23, 128
          %s1131 = scalar_lea.hbm %s5, %s1130
          %s1133 = sshll.u32 %s1123, 4
          %s1134 = int_to_ptr.vmem [resolvable:$true] %s1133
          %1136 = dma.vmem_to_hbm [thread:$0]  %s1134, 128, %s1131, %s1120
        $region56: #{tpu_custom_call.1} parent=39 // pred_fallthru
          _
      $region40: #{tpu_custom_call.1} parent=5 // pred_fallthru
        _
      %p1137 = scmp.le.s32.totalorder 2, %s18
      // Predicated region
      $region57: #{tpu_custom_call.1} parent=5 // pred_check
        %p1138 = pneg %p1137
      $region58: #{tpu_custom_call.1} parent=5 // pred_check_branch
        %1140 = sbr.rel (%p1138) target = $region60
      $region59: #{tpu_custom_call.1} parent=5 // pred_region
        %s1141 = ssub.s32 %s18, 2
        // Predicated region
        $region61: #{tpu_custom_call.1} parent=59 // pred_check
          %p1142 = pneg %p157
        $region62: #{tpu_custom_call.1} parent=59 // pred_check_branch
          %1144 = sbr.rel (%p1142) target = $region64
        $region63: #{tpu_custom_call.1} parent=59 // pred_region
          %s1145 = sand.u32 %s142, 1
          %s1146 = scalar_lea.sflag [#allocation4], %s1145
          %s1147 = sand.u32 %s142, 1
          %s1148 = smul.addr %s1147, 8
          %s1149 = scalar_lea.vmem [#allocation8], %s1148
          %1150 = dma.done %s1146, 128
        $region64: #{tpu_custom_call.1} parent=59 // pred_fallthru
          _
      $region60: #{tpu_custom_call.1} parent=5 // pred_fallthru
        _
    $region6: #{tpu_custom_call.1} parent=1 // loop_footer
      %s22 = sadd.s32 1, %s18
    $region7: #{tpu_custom_call.1} parent=1 // loop_footer_branch
      %17 = sbr.rel target = $region3
    $region8: #{tpu_custom_call.1} parent=1 // loop_exit
      _
    %1151 = vsyncpa [#allocation3], 1
    %s1152 = scalar_lea.sflag [#allocation3], 1
    %1153 = vsyncpa %s1152, 1
    %1154 = vsyncpa [#allocation6], 1
    %1155 = vsyncpa [#allocation4], 1
    %s1156 = scalar_lea.sflag [#allocation4], 1
    %1157 = vsyncpa %s1156, 1

</llo_original>
